<compile_context>
chip_gen: v5e
topology: v5e:2x2
jax: 0.10.0
libtpu: 0.0.40
codegen_flags: <defaults>
</compile_context>

<pallas_src>
import jax
import jax.numpy as jnp
from jax.experimental import pallas as pl
from jax.experimental.pallas import tpu as pltpu


# ----------------------------- kernels ------------------------------------ #

def _copy_kernel(x_ref, o_ref):
    # Input block already contains exactly the kept window -> straight copy.
    o_ref[...] = x_ref[...]


def _slice_kernel(x_ref, o_ref):
    # x_ref is (TILE_R, in_cols) with in_cols >= L_out; keep the first L_out
    # columns (static slice along the last axis).
    l_out = o_ref.shape[-1]
    o_ref[...] = x_ref[:, :l_out]


# ----------------------------- tiling helpers ------------------------------ #

def _round_up(x, m):
    return ((x + m - 1) // m) * m


def _target_block_bytes():
    """Per-block DMA target: ~2 MiB on 128-MiB-VMEM parts (v5e/v6e), ~6 MiB on
    v7x (64 MiB VMEM) where the per-grid-step overhead is proportionally more
    expensive at ~3.2 TB/s HBM."""
    try:
        vmem = pltpu.get_tpu_info().vmem_capacity_bytes
    except Exception:  # conservative fallback if the query is unavailable
        vmem = 128 << 20
    return (6 << 20) if vmem <= (64 << 20) else (2 << 20)


def _pick_tile_rows(nc, row_bytes, sublane, target_bytes, min_steps=2):
    """Sublane-aligned row-tile size targeting `target_bytes` blocks while
    keeping at least `min_steps` grid steps (double-buffering, and >=2 steps
    so v7x's 2 TensorCores both get work)."""
    if nc <= sublane:
        return nc                                    # full extent: always legal
    t = max(1, target_bytes // max(row_bytes, 1))    # fit the DMA budget
    t = min(t, max(1, nc // min_steps))              # keep >= min_steps steps
    t = max(sublane, (t // sublane) * sublane)       # sublane alignment
    return min(t, nc)


# ----------------------------- wrapper ------------------------------------ #

def chomp1d(x: jax.Array, chomp_size: int, *, _target_bytes=None) -> jax.Array:
    """Pallas equivalent of Chomp1d(chomp_size)(x) for x of shape (N, C, L).

    `_target_bytes` is a testing hook to force the column-tiled path at small
    shapes; leave it as None in real use.
    """
    assert x.ndim == 3, "expected (N, C, L)"
    n, c, l = x.shape
    # Note: PyTorch's x[:, :, :-0] would be an *empty* tensor, so chomp_size=0
    # is intentionally rejected rather than treated as a no-op.
    assert 0 < chomp_size < l, "chomp_size must be in (0, L)"
    l_out = l - chomp_size

    nc = n * c
    x2 = x.reshape(nc, l)                        # free contiguous reshape
    itemsize = jnp.dtype(x.dtype).itemsize
    sublane = max(8, 32 // itemsize)             # 8 f32, 16 bf16, 32 int8
    target_bytes = _target_bytes if _target_bytes is not None else _target_block_bytes()

    row_out_bytes = l_out * itemsize

    if row_out_bytes * sublane > 2 * target_bytes:
        # ---- Very long rows: 2-D grid over (row blocks, 128-aligned column
        # blocks).  Input and output column offsets are identical (the kept
        # window starts at 0), so this is a pure block copy; the partial last
        # column block is handled by Pallas masking.
        tile_c = max(128, ((target_bytes // (sublane * itemsize)) // 128) * 128)
        tile_c = min(tile_c, _round_up(l_out, 128))
        tile_r = _pick_tile_rows(nc, tile_c * itemsize, sublane,
                                 target_bytes, min_steps=1)
        grid = (pl.cdiv(nc, tile_r), pl.cdiv(l_out, tile_c))
        kernel = _copy_kernel
        in_spec = pl.BlockSpec((tile_r, tile_c), lambda i, j: (i, j))
        out_spec = pl.BlockSpec((tile_r, tile_c), lambda i, j: (i, j))
        semantics = ("parallel", "parallel")
        in_blk = out_blk = tile_r * tile_c * itemsize
        read_cols = min(l, pl.cdiv(l_out, tile_c) * tile_c)
    else:
        # ---- Row tiling only.  Decide how many input columns to read per row:
        # either a 128-aligned window of the kept columns (strided DMA that
        # skips the chomped tail) or the full contiguous row (when the strided
        # read would use tiny chunks or save almost nothing).
        kept = min(l, _round_up(l_out, 128))
        kept_bytes = kept * itemsize
        saved_bytes = (l - kept) * itemsize
        use_window = kept < l and (
            (kept_bytes >= 1024 and saved_bytes * 16 >= l * itemsize)
            or saved_bytes >= 4 * kept_bytes)        # huge chomp: always skip it
        in_cols = kept if use_window else l

        tile_r = _pick_tile_rows(nc, max(in_cols, l_out) * itemsize, sublane,
                                 target_bytes, min_steps=2)
        grid = (pl.cdiv(nc, tile_r),)
        kernel = _copy_kernel if in_cols == l_out else _slice_kernel
        # in_cols is either a multiple of 128 or equal to the full L, so the
        # BlockSpec (8,128) constraint is always satisfied.
        in_spec = pl.BlockSpec((tile_r, in_cols), lambda i: (i, 0))
        out_spec = pl.BlockSpec((tile_r, l_out), lambda i: (i, 0))
        semantics = ("parallel",)
        in_blk = tile_r * in_cols * itemsize
        out_blk = tile_r * l_out * itemsize
        read_cols = in_cols

    # VMEM budget: 2x double-buffered (in + out) blocks plus slack, capped well
    # below v7x's 64 MiB physical VMEM to leave compiler-scratch headroom.
    vmem_limit = min(48 << 20, max(16 << 20, 2 * (in_blk + out_blk) + (2 << 20)))

    bytes_accessed = nc * (read_cols + l_out) * itemsize

    y2 = pl.pallas_call(
        kernel,
        out_shape=jax.ShapeDtypeStruct((nc, l_out), x.dtype),
        grid_spec=pltpu.PrefetchScalarGridSpec(
            num_scalar_prefetch=0,
            grid=grid,
            in_specs=[in_spec],
            out_specs=out_spec,
        ),
        compiler_params=pltpu.CompilerParams(
            dimension_semantics=semantics,
            vmem_limit_bytes=vmem_limit,
        ),
        cost_estimate=pl.CostEstimate(
            flops=0, transcendentals=0, bytes_accessed=bytes_accessed),
    )(x2)

    return y2.reshape(n, c, l_out)


# ----------------------------- demo / check -------------------------------- #

if __name__ == "__main__":
    key = jax.random.PRNGKey(0)

    # Case 1: the module's own small shape (N=2, C=4, L=16, chomp=3):
    # unaligned L_out -> full-row load + in-VMEM slice.
    x1 = jax.random.normal(key, (2, 4, 16), dtype=jnp.float32)
    y1 = jax.block_until_ready(chomp1d(x1, 3))
    assert y1.shape == (2, 4, 13), y1.shape
    assert jnp.array_equal(y1, x1[:, :, :-3]), "mismatch (unaligned path)"

    # Case 2: lane-aligned kept window -> strided windowed read, pure copy
    # (chomped columns never leave HBM).
    x2 = jax.random.normal(key, (2, 4, 384), dtype=jnp.float32)
    y2 = jax.block_until_ready(chomp1d(x2, 128))
    assert y2.shape == (2, 4, 256), y2.shape
    assert jnp.array_equal(y2, x2[:, :, :-128]), "mismatch (windowed path)"

    # Case 3: force the column-tiled (long-row) path via a tiny block target.
    x3 = jax.random.normal(key, (2, 4, 1408), dtype=jnp.float32)
    y3 = jax.block_until_ready(chomp1d(x3, 128, _target_bytes=1 << 14))
    assert y3.shape == (2, 4, 1280), y3.shape
    assert jnp.array_equal(y3, x3[:, :, :-128]), "mismatch (column-tiled path)"

    print("KERNEL_OK")
</pallas_src>

<mosaic_0001>
module attributes {stable_mosaic.version = 11 : i64} {
  func.func @_slice_kernel(%arg0: i32, %arg1: memref<8x16xf32, #tpu.memory_space<vmem>>, %arg2: memref<8x13xf32, #tpu.memory_space<vmem>>) attributes {dimension_semantics = [#tpu.dimension_semantics<parallel>], iteration_bounds = array<i64: 1>, scalar_prefetch = 0 : i64, scratch_operands = 0 : i64, tpu.core_type = #tpu.core_type<tc>, window_params = [{transform_indices = @transform_0, window_bounds = array<i64: 8, 16>}, {transform_indices = @transform_1, window_bounds = array<i64: 8, 13>}]} {
    %c0 = arith.constant 0 : index
    %c0_0 = arith.constant 0 : index
    %0 = vector.load %arg1[%c0, %c0_0] : memref<8x16xf32, #tpu.memory_space<vmem>>, vector<8x13xf32>
    %c0_1 = arith.constant 0 : index
    %c0_2 = arith.constant 0 : index
    %1 = vector.load %arg2[%c0_1, %c0_2] : memref<8x13xf32, #tpu.memory_space<vmem>>, vector<8x13xf32>
    tpu.vector_store %arg2[%c0_1, %c0_2], %0 {strides = array<i32>} : memref<8x13xf32, #tpu.memory_space<vmem>>, vector<8x13xf32>,
    return
  }
  func.func @transform_0(%arg0: i32) -> (i32, i32) {
    %c0_i32 = arith.constant 0 : i32
    %c0_i32_0 = arith.constant 0 : i32
    return %arg0, %c0_i32 : i32, i32
  }
  func.func @transform_1(%arg0: i32) -> (i32, i32) {
    %c0_i32 = arith.constant 0 : i32
    %c0_i32_0 = arith.constant 0 : i32
    return %arg0, %c0_i32 : i32, i32
  }
}

</mosaic_0001>

<llo_original>
// kernel: tpu_custom_call.1
$region0: #{tpu_custom_call.1}
  #allocation0 [shape = 'u32[]', space=smem, size = 0x4, offset = 0x4, fixed_abs, tag = 'smem constant byte address 0x4 - core index']
  #allocation1 [shape = 'u32[72,128]{1,0:T(1,128)}', space=vmem, size = 0x9000, scoped, tag = 'internal scratch']
  %s0 = inlined_call_operand.hbm [shape: f32[8,16], index: 0, kind: input, shape index: {}]
  %s1 = inlined_call_operand.hbm [shape: f32[8,13], index: 1, kind: output, shape index: {}]
  %s2 = sld [smem:[#allocation0]]
  $region18: #{tpu_custom_call.1} parent=0
    _
  %s4 = ssub.s32 1, %s2
  %s5 = scalar_select 0, %s4, %s2
  $region1: #{tpu_custom_call.1} parent=0
    #allocation2 [shape = 'u8[4096]{0}', space=vmem, size = 0x1000, scoped, tag = 'input window, operand 0, single buffered']
    #allocation3 [shape = 's32[1]{0}', space=sflag, size = 0x4, scoped, tag = 'scoped memory for tpu_custom_call.1']
    #allocation4 [shape = 's32[1]{0}', space=sflag, size = 0x4, scoped, tag = 'scoped memory for tpu_custom_call.1']
    #allocation5 [shape = 'u8[4096]{0}', space=vmem, size = 0x1000, scoped, tag = 'output window, operand 0, single buffered']
    %6 = vsyncpa [#allocation3], 0
    %7 = vsyncpa [#allocation4], 0
    // Predicated region
    $region2: #{tpu_custom_call.1} parent=1 // pred_check
      _
    $region3: #{tpu_custom_call.1} parent=1 // pred_check_branch
      %9 = sbr.rel (0) target = $region5
    $region4: #{tpu_custom_call.1} parent=1 // pred_region
      %11 = vsyncadd [#allocation3], 0
      %s13 = sshll.u32 %s0, 4
      %s14 = int_to_ptr.hbm [resolvable:$true] %s13
      %s15 = sshll.u32 [#allocation2], 4
      %s16 = int_to_ptr.vmem [resolvable:$true] %s15
      %18 = dma.hbm_to_vmem [thread:$0]  %s14, 128, %s16, [#allocation3]
    $region5: #{tpu_custom_call.1} parent=1 // pred_fallthru
      _
    // Predicated region
    $region6: #{tpu_custom_call.1} parent=1 // pred_check
      _
    $region7: #{tpu_custom_call.1} parent=1 // pred_check_branch
      %20 = sbr.rel (0) target = $region9
    $region8: #{tpu_custom_call.1} parent=1 // pred_region
      %22 = dma.done [#allocation3], 128
    $region9: #{tpu_custom_call.1} parent=1 // pred_fallthru
      _
    %v23 = vld [vmem:[#allocation2] sm:$0xff]
    %vm24 = vcmask 105472
    %25 = vst.msk [vmem:[#allocation5] sm:$0xff] %vm24, %v23
    // Predicated region
    $region10: #{tpu_custom_call.1} parent=1 // pred_check
      _
    $region11: #{tpu_custom_call.1} parent=1 // pred_check_branch
      %27 = sbr.rel (0) target = $region13
    $region12: #{tpu_custom_call.1} parent=1 // pred_region
      %29 = vsyncadd [#allocation4], 0
      %s31 = sshll.u32 [#allocation5], 4
      %s32 = int_to_ptr.vmem [resolvable:$true] %s31
      %s33 = sshll.u32 %s1, 4
      %s34 = int_to_ptr.hbm [resolvable:$true] %s33
      %36 = dma.vmem_to_hbm [thread:$0]  %s32, 128, %s34, [#allocation4]
    $region13: #{tpu_custom_call.1} parent=1 // pred_fallthru
      _
    // Predicated region
    $region14: #{tpu_custom_call.1} parent=1 // pred_check
      _
    $region15: #{tpu_custom_call.1} parent=1 // pred_check_branch
      %38 = sbr.rel (0) target = $region17
    $region16: #{tpu_custom_call.1} parent=1 // pred_region
      %40 = dma.done [#allocation4], 128
    $region17: #{tpu_custom_call.1} parent=1 // pred_fallthru
      _
    %41 = vsyncpa [#allocation3], 1
    %42 = vsyncpa [#allocation4], 1

</llo_original>
